<compile_context>
chip_gen: v5e
topology: v5e:2x2
jax: 0.10.0
libtpu: 0.0.40
codegen_flags: <defaults>
</compile_context>

<pallas_src>
import functools

import jax
import jax.numpy as jnp
from jax.experimental import pallas as pl
from jax.experimental.pallas import tpu as pltpu


def _round_up(n, m):
    return ((n + m - 1) // m) * m


def _logreg_kernel(x_ref, w_ref, b_ref, o_ref):
    # MXU matmul with f32 accumulation + bias add on the VPU, all in VMEM.
    acc = jnp.dot(x_ref[...], w_ref[...], preferred_element_type=jnp.float32)
    o_ref[...] = (acc + b_ref[...]).astype(o_ref.dtype)


def logreg_forward(x, weight, bias, *, tile_b=512, compute_dtype=None):
    """Forward pass of LogReg.

    x:       (B, F)   float32 (PyTorch-style row-major 2-D input)
    weight:  (C, F+1) float32 (PyTorch nn.Linear layout)
    bias:    (C,)     float32
    compute_dtype: optional narrower dtype (e.g. jnp.bfloat16) for the X / W
        streams; accumulation stays f32 and the output is returned in f32.
    returns: (B, C)   float32 logits
    """
    B, F = x.shape
    C = weight.shape[0]
    assert weight.shape[1] == F + 1, "weight must be (C, F+1) as in nn.Linear(F+1, C)"

    # Fold the implicit ones column into the bias (kills the concat + extra HBM pass).
    w_feat = weight[:, :F].T                                  # (F, C)
    b_eff = (bias + weight[:, F]).reshape(1, C).astype(jnp.float32)

    if compute_dtype is not None:
        x_k = x.astype(compute_dtype)
        w_k = w_feat.astype(compute_dtype)
    else:
        x_k = x
        w_k = w_feat

    # Batch tile: multiple of 8 sublanes, no larger than the (padded) batch,
    # capped at tile_b (default 512) to stay well inside VMEM on all generations
    # (v7x included) once double-buffering is accounted for.
    tb = min(tile_b, _round_up(B, 8))
    tb = max(8, (tb // 8) * 8)
    B_pad = _round_up(B, tb)
    if B_pad != B:
        x_k = jnp.pad(x_k, ((0, B_pad - B), (0, 0)))

    grid = (B_pad // tb,)
    in_bytes = jnp.dtype(x_k.dtype).itemsize
    cost = pl.CostEstimate(
        flops=2 * B_pad * F * C,
        transcendentals=0,
        bytes_accessed=(B_pad * F * in_bytes      # X stream (dominant)
                        + F * C * in_bytes        # folded weight
                        + C * 4                   # folded bias
                        + B_pad * C * 4),         # logits out
    )

    out = pl.pallas_call(
        _logreg_kernel,
        out_shape=jax.ShapeDtypeStruct((B_pad, C), jnp.float32),
        grid=grid,
        in_specs=[
            pl.BlockSpec((tb, F), lambda i: (i, 0)),      # batch-tiled X
            pl.BlockSpec((F, C), lambda i: (0, 0)),       # resident weight
            pl.BlockSpec((1, C), lambda i: (0, 0)),       # resident bias
        ],
        out_specs=pl.BlockSpec((tb, C), lambda i: (i, 0)),
        compiler_params=pltpu.CompilerParams(
            dimension_semantics=("parallel",)),           # shards across TCs on v7x
        cost_estimate=cost,
    )(x_k, w_k, b_eff)

    return out[:B]


def init_params(key, num_feats, classes):
    """Deterministic nn.Linear-style init: U(-1/sqrt(fan_in), +1/sqrt(fan_in))."""
    fan_in = num_feats + 1
    bound = 1.0 / jnp.sqrt(jnp.float32(fan_in))
    kw, kb = jax.random.split(key)
    weight = jax.random.uniform(kw, (classes, fan_in), jnp.float32,
                                minval=-bound, maxval=bound)
    bias = jax.random.uniform(kb, (classes,), jnp.float32,
                              minval=-bound, maxval=bound)
    return weight, bias


if __name__ == "__main__":
    key = jax.random.PRNGKey(0)
    k_x, k_p = jax.random.split(key)

    B, F, C = 8, 32, 4          # small shapes consistent with LogReg(num_feats=F, classes=C)
    x = jax.random.normal(k_x, (B, F), jnp.float32)
    weight, bias = init_params(k_p, F, C)

    # Reference in plain JAX (same math as the PyTorch module).
    new_x = jnp.concatenate([x, jnp.ones((B, 1), jnp.float32)], axis=1)
    ref = new_x @ weight.T + bias

    # f32 path (exact).
    out_f32 = jax.block_until_ready(logreg_forward(x, weight, bias))
    assert out_f32.shape == (B, C)
    assert jnp.allclose(out_f32, ref, atol=1e-5, rtol=1e-5)

    # bf16 input path (bandwidth-optimized; f32 accumulation on the MXU).
    out_bf16 = jax.block_until_ready(
        logreg_forward(x, weight, bias, compute_dtype=jnp.bfloat16))
    assert out_bf16.shape == (B, C)
    assert jnp.allclose(out_bf16, ref, atol=3e-2, rtol=3e-2)

    print("KERNEL_OK")
</pallas_src>

<mosaic_0001>
module attributes {stable_mosaic.version = 11 : i64} {
  func.func @_logreg_kernel(%arg0: i32, %arg1: memref<8x32xf32, #tpu.memory_space<vmem>>, %arg2: memref<32x4xf32, #tpu.memory_space<vmem>>, %arg3: memref<1x4xf32, #tpu.memory_space<vmem>>, %arg4: memref<8x4xf32, #tpu.memory_space<vmem>>) attributes {dimension_semantics = [#tpu.dimension_semantics<parallel>], iteration_bounds = array<i64: 1>, scalar_prefetch = 0 : i64, scratch_operands = 0 : i64, tpu.core_type = #tpu.core_type<tc>, window_params = [{transform_indices = @transform_0, window_bounds = array<i64: 8, 32>}, {pipeline_mode = #tpu.pipeline_mode<synchronous>, transform_indices = @transform_1, window_bounds = array<i64: 32, 4>}, {pipeline_mode = #tpu.pipeline_mode<synchronous>, transform_indices = @transform_2, window_bounds = array<i64: 1, 4>}, {transform_indices = @transform_3, window_bounds = array<i64: 8, 4>}]} {
    %c0 = arith.constant 0 : index
    %c0_0 = arith.constant 0 : index
    %0 = vector.load %arg1[%c0, %c0_0] : memref<8x32xf32, #tpu.memory_space<vmem>>, vector<8x32xf32>
    %c0_1 = arith.constant 0 : index
    %c0_2 = arith.constant 0 : index
    %1 = vector.load %arg2[%c0_1, %c0_2] : memref<32x4xf32, #tpu.memory_space<vmem>>, vector<32x4xf32>
    %cst = arith.constant dense<0.000000e+00> : vector<8x4xf32>
    %2 = tpu.matmul %0, %1, %cst {dimension_numbers = #tpu.dot_dimension_numbers<[1], [0], [0], [1], [0, 0, 1, 1], [], []>} : vector<8x32xf32>, vector<32x4xf32>, vector<8x4xf32> -> vector<8x4xf32>
    %c0_3 = arith.constant 0 : index
    %c0_4 = arith.constant 0 : index
    %3 = vector.load %arg3[%c0_3, %c0_4] : memref<1x4xf32, #tpu.memory_space<vmem>>, vector<1x4xf32>
    %4 = vector.broadcast %3 : vector<1x4xf32> to vector<8x4xf32>
    %5 = arith.addf %2, %4 : vector<8x4xf32>
    %c0_5 = arith.constant 0 : index
    %c0_6 = arith.constant 0 : index
    %6 = vector.load %arg4[%c0_5, %c0_6] : memref<8x4xf32, #tpu.memory_space<vmem>>, vector<8x4xf32>
    tpu.vector_store %arg4[%c0_5, %c0_6], %5 {strides = array<i32>} : memref<8x4xf32, #tpu.memory_space<vmem>>, vector<8x4xf32>,
    return
  }
  func.func @transform_0(%arg0: i32) -> (i32, i32) {
    %c0_i32 = arith.constant 0 : i32
    %c0_i32_0 = arith.constant 0 : i32
    return %arg0, %c0_i32 : i32, i32
  }
  func.func @transform_1(%arg0: i32) -> (i32, i32) {
    %c0_i32 = arith.constant 0 : i32
    %c0_i32_0 = arith.constant 0 : i32
    %c0_i32_1 = arith.constant 0 : i32
    return %c0_i32, %c0_i32_0 : i32, i32
  }
  func.func @transform_2(%arg0: i32) -> (i32, i32) {
    %c0_i32 = arith.constant 0 : i32
    %c0_i32_0 = arith.constant 0 : i32
    %c0_i32_1 = arith.constant 0 : i32
    return %c0_i32, %c0_i32_0 : i32, i32
  }
  func.func @transform_3(%arg0: i32) -> (i32, i32) {
    %c0_i32 = arith.constant 0 : i32
    %c0_i32_0 = arith.constant 0 : i32
    return %arg0, %c0_i32 : i32, i32
  }
}

</mosaic_0001>

<llo_original>
// kernel: tpu_custom_call.1
$region0: #{tpu_custom_call.1}
  #allocation0 [shape = 'u32[]', space=smem, size = 0x4, offset = 0x4, fixed_abs, tag = 'smem constant byte address 0x4 - core index']
  #allocation1 [shape = 'u32[72,128]{1,0:T(1,128)}', space=vmem, size = 0x9000, scoped, tag = 'internal scratch']
  %s0 = inlined_call_operand.vmem [shape: f32[8,32], index: 0, kind: input, shape index: {}]
  %s1 = inlined_call_operand.vmem [shape: f32[32,4], index: 1, kind: input, shape index: {}]
  %s2 = inlined_call_operand.vmem [shape: f32[1,4], index: 2, kind: input, shape index: {}]
  %s3 = inlined_call_operand.vmem [shape: f32[8,4], index: 3, kind: output, shape index: {}]
  %s4 = sld [smem:[#allocation0]]
  $region22: #{tpu_custom_call.1} parent=0
    _
  %s6 = ssub.s32 1, %s4
  %s7 = scalar_select 0, %s6, %s4
  // Predicated region
  $region2: #{tpu_custom_call.1} parent=0 // pred_check
    _
  $region3: #{tpu_custom_call.1} parent=0 // pred_check_branch
    %9 = sbr.rel (0) target = $region5
  $region4: #{tpu_custom_call.1} parent=0 // pred_region
    _
  $region5: #{tpu_custom_call.1} parent=0 // pred_fallthru
    _
  // Predicated region
  $region6: #{tpu_custom_call.1} parent=0 // pred_check
    _
  $region7: #{tpu_custom_call.1} parent=0 // pred_check_branch
    %11 = sbr.rel (0) target = $region9
  $region8: #{tpu_custom_call.1} parent=0 // pred_region
    _
  $region9: #{tpu_custom_call.1} parent=0 // pred_fallthru
    _
  // Predicated region
  $region10: #{tpu_custom_call.1} parent=0 // pred_check
    _
  $region11: #{tpu_custom_call.1} parent=0 // pred_check_branch
    %13 = sbr.rel (0) target = $region13
  $region12: #{tpu_custom_call.1} parent=0 // pred_region
    _
  $region13: #{tpu_custom_call.1} parent=0 // pred_fallthru
    _
  %v14 = vld [vmem:[%s0] sm:$0xff]
  %v15 = vld [vmem:[%s1] sm:$0xff]
  %v16 = vld [vmem:[%s1 + $0x8] sm:$0xff]
  %v17 = vld [vmem:[%s1 + $0x10] sm:$0xff]
  %v18 = vld [vmem:[%s1 + $0x18] sm:$0xff]
  %v19 = vld [vmem:[%s2] sm:$0x1]
  %v21 = vperm.slane %v19, 0
  %vm23 = vcmask 261120
  %v25 = vsel %vm23, %v14, 0
  %27 = vmatpush.msra.mxu0 0.0
  %28 = vmatpush.msra.mxu0 0.0
  %29 = vmatpush.msra.mxu0 0.0
  %30 = vmatpush.msra.mxu0 0.0
  %31 = vmatpush.msra.mxu0 0.0
  %32 = vmatpush.msra.mxu0 0.0
  %33 = vmatpush.msra.mxu0 0.0
  %34 = vmatpush.msra.mxu0 0.0
  %35 = vmatpush.msra.mxu0 0.0
  %36 = vmatpush.msra.mxu0 0.0
  %37 = vmatpush.msra.mxu0 0.0
  %38 = vmatpush.msra.mxu0 0.0
  %39 = vmatpush.msra.mxu0 %v18
  %40 = vmatpush.msra.mxu0 %v17
  %41 = vmatpush.msra.mxu0 %v16
  %42 = vmatpush.msra.mxu0 %v15
  %43 = vmatmul.f32.gmra.mxu0 %v25
  %v44 = vpop.f32.mrf.mxu0
  %v45 = vadd.f32 %v21, %v44
  %46 = vdwg.mxu0
  %vm47 = vcmask 31744
  %48 = vst.msk [vmem:[%s3] sm:$0xff] %vm47, %v45
  // Predicated region
  $region14: #{tpu_custom_call.1} parent=0 // pred_check
    _
  $region15: #{tpu_custom_call.1} parent=0 // pred_check_branch
    %50 = sbr.rel (0) target = $region17
  $region16: #{tpu_custom_call.1} parent=0 // pred_region
    _
  $region17: #{tpu_custom_call.1} parent=0 // pred_fallthru
    _
  // Predicated region
  $region18: #{tpu_custom_call.1} parent=0 // pred_check
    _
  $region19: #{tpu_custom_call.1} parent=0 // pred_check_branch
    %52 = sbr.rel (0) target = $region21
  $region20: #{tpu_custom_call.1} parent=0 // pred_region
    _
  $region21: #{tpu_custom_call.1} parent=0 // pred_fallthru
    _

</llo_original>
